<compile_context>
chip_gen: v5e
topology: v5e:2x2
jax: 0.10.0
libtpu: 0.0.40
codegen_flags: <defaults>
</compile_context>

<pallas_src>
import functools

import jax
import jax.numpy as jnp
from jax import lax
from jax.experimental import pallas as pl
from jax.experimental.pallas import tpu as pltpu


def _round_up(x, m):
    return ((x + m - 1) // m) * m


def _tpu_cores_per_chip():
    # v7x has 2 TensorCores per chip; v5e / v6e have 1.
    try:
        kind = jax.devices()[0].device_kind.lower()
    except Exception:
        return 1
    return 2 if ("v7" in kind or "7x" in kind) else 1


def _joints_mse_kernel(*refs, scale, valid_rows, tile_rows, chunk_rows,
                       tiles_per_split, need_mask, use_weight):
    # refs = (pred_ref, gt_ref, [w_ref], out_ref, acc_ref)
    #   pred_ref / gt_ref : (TR, P) native-dtype tiles (upcast to f32 per chunk)
    #   w_ref             : (W_rows, 1) f32, VMEM-resident, sliced with pl.ds
    #   out_ref           : (1, 128) f32 lane-dense per-split partial
    #   acc_ref           : (CH, P) f32 accumulator (scratch)
    if use_weight:
        pred_ref, gt_ref, w_ref, out_ref, acc_ref = refs
    else:
        pred_ref, gt_ref, out_ref, acc_ref = refs
        w_ref = None

    c = pl.program_id(0)          # split / core axis
    i = pl.program_id(1)          # row-tile (reduction) axis

    @pl.when(i == 0)
    def _init():
        acc_ref[...] = jnp.zeros_like(acc_ref)

    tile = c * tiles_per_split + i
    n_chunks = tile_rows // chunk_rows

    def chunk(r, carry):
        if isinstance(r, int):
            start = r * chunk_rows                       # static slice
        else:
            start = pl.multiple_of(r * chunk_rows, chunk_rows)
        p = pred_ref[pl.ds(start, chunk_rows), :].astype(jnp.float32)
        g = gt_ref[pl.ds(start, chunk_rows), :].astype(jnp.float32)
        d = p - g
        if use_weight:
            w_start = pl.multiple_of(tile * tile_rows + start, chunk_rows)
            d = d * w_ref[pl.ds(w_start, chunk_rows), :]  # (CH,1) broadcast
        d2 = d * d
        if need_mask:
            # Select (NOT multiply-by-mask): rows of an overhanging edge tile
            # may hold arbitrary garbage, including NaN/Inf.
            row_ids = (tile * tile_rows + start
                       + lax.broadcasted_iota(jnp.int32, (chunk_rows, 1), 0))
            d2 = jnp.where(row_ids < valid_rows, d2, 0.0)
        acc_ref[...] += d2
        return carry

    if n_chunks <= 16:
        for r in range(n_chunks):                        # short static unroll
            chunk(r, 0)
    else:
        lax.fori_loop(0, n_chunks, chunk, 0)             # bounded live ranges

    @pl.when(i == pl.num_programs(1) - 1)
    def _finalize():
        total = jnp.sum(acc_ref[...]) * scale            # single XLU reduce
        out_ref[...] = total * jnp.ones((1, 128), jnp.float32)


def joints_mse_loss(output, target, target_weight, use_target_weight=True,
                    row_tile=None):
    """output, target: (B, J, H, W); target_weight: (B, J, 1). Returns scalar f32."""
    B, J, H, W = output.shape
    P = H * W
    R = B * J
    # 0.5 * (1/J) * (1/(B*P)): per-joint MSE mean is over B*H*W elements.
    scale = 0.5 / float(J * B * P)

    # Pure views, no HBM copies: keep native dtype, flatten to (R, P).
    pred = output.reshape(R, P)
    gt = target.reshape(R, P)
    itemsize = int(jnp.dtype(pred.dtype).itemsize)

    ncores = _tpu_cores_per_chip()
    if ncores > 1:                       # v7x: 64 MiB VMEM physical, 2 TCs
        vmem_limit = 48 * 1024 * 1024
        block_bytes = 6 * 1024 * 1024    # 2 inputs x 3 buffers ~= 36 MiB
    else:                                # v5e / v6e: 128 MiB VMEM, 1 TC
        vmem_limit = 64 * 1024 * 1024
        block_bytes = 8 * 1024 * 1024    # 2 inputs x 2 buffers ~= 32 MiB

    # Row-tile from the byte budget (not a fixed row cap).
    if row_tile is None:
        tr = max(8, (block_bytes // (P * itemsize)) // 8 * 8)
    else:
        tr = max(8, (int(row_tile) // 8) * 8)
    tr = min(tr, _round_up(R, 8))
    if tr >= 32:
        tr = (tr // 32) * 32
        ch = 32                          # in-kernel accumulation chunk (rows)
    else:
        ch = tr
    num_tiles = pl.cdiv(R, tr)

    # Split axis only on multi-TensorCore chips, and only without a wasted
    # (fully masked) duplicate tail tile.
    nsplit = ncores
    if nsplit > 1 and num_tiles % nsplit != 0:
        t_target = _round_up(num_tiles, nsplit)
        tr2 = _round_up(pl.cdiv(R, t_target), ch)
        nt2 = pl.cdiv(R, tr2)
        if nt2 % nsplit == 0:
            tr, num_tiles = tr2, nt2
        else:
            nsplit = 1
    tiles_per_split = num_tiles // nsplit
    need_mask = (num_tiles * tr != R)

    # target_weight: one small VMEM-resident block (never re-DMA'd). Pad its
    # rows (a few KB at most) so in-kernel pl.ds slices stay in bounds.
    w_padded = None
    w_rows = num_tiles * tr
    if use_target_weight:
        w_padded = target_weight.reshape(R, 1).astype(jnp.float32)
        if w_rows != R:
            w_padded = jnp.pad(w_padded, ((0, w_rows - R), (0, 0)))

    def _make_call(core_parallel, buffers):
        def row_map(c, i):
            return (c * tiles_per_split + i, 0)

        if buffers is not None:
            pred_spec = pl.BlockSpec((tr, P), row_map,
                                     pipeline_mode=pl.Buffered(buffers))
            gt_spec = pl.BlockSpec((tr, P), row_map,
                                   pipeline_mode=pl.Buffered(buffers))
        else:
            pred_spec = pl.BlockSpec((tr, P), row_map)
            gt_spec = pl.BlockSpec((tr, P), row_map)

        in_specs = [pred_spec, gt_spec]
        args = [pred, gt]
        if use_target_weight:
            in_specs.append(pl.BlockSpec((w_rows, 1), lambda c, i: (0, 0)))
            args.append(w_padded)

        kernel = functools.partial(
            _joints_mse_kernel,
            scale=scale, valid_rows=R, tile_rows=tr, chunk_rows=ch,
            tiles_per_split=tiles_per_split, need_mask=need_mask,
            use_weight=use_target_weight)

        sem0 = pltpu.CORE_PARALLEL if core_parallel else pltpu.ARBITRARY
        cost = pl.CostEstimate(
            flops=int(5 * R * P), transcendentals=0,
            bytes_accessed=int(2 * R * P * itemsize + R * 4 + nsplit * 128 * 4))

        return pl.pallas_call(
            kernel,
            out_shape=jax.ShapeDtypeStruct((1, nsplit * 128), jnp.float32),
            grid_spec=pltpu.PrefetchScalarGridSpec(
                num_scalar_prefetch=0,
                grid=(nsplit, tiles_per_split),
                in_specs=in_specs,
                out_specs=pl.BlockSpec((1, 128), lambda c, i: (0, c)),
                scratch_shapes=[pltpu.VMEM((ch, P), jnp.float32)],
            ),
            compiler_params=pltpu.CompilerParams(
                dimension_semantics=(sem0, pltpu.ARBITRARY),
                vmem_limit_bytes=vmem_limit),
            cost_estimate=cost,
        )(*args)

    if nsplit > 1:
        try:
            out = _make_call(core_parallel=True, buffers=3)
        except Exception:
            # Conservative fallback if the 2-TC configuration cannot lower.
            nsplit = 1
            tiles_per_split = num_tiles
            out = _make_call(core_parallel=False, buffers=None)
    else:
        out = _make_call(core_parallel=False, buffers=None)

    partials = out.reshape(nsplit, 128)[:, 0]
    return jnp.sum(partials)


def _reference(output, target, target_weight, use_target_weight=True):
    # Pure-JAX reference mirroring the PyTorch loop.
    B, J = output.shape[0], output.shape[1]
    hp = output.reshape(B, J, -1).astype(jnp.float32)
    hg = target.reshape(B, J, -1).astype(jnp.float32)
    loss = 0.0
    for idx in range(J):
        p = hp[:, idx, :]
        g = hg[:, idx, :]
        if use_target_weight:
            wj = target_weight[:, idx]  # (B, 1)
            p = p * wj
            g = g * wj
        loss = loss + 0.5 * jnp.mean((p - g) ** 2)
    return loss / J


if __name__ == "__main__":
    key = jax.random.PRNGKey(0)
    k1, k2, k3 = jax.random.split(key, 3)

    # Primary small test (matches module usage).
    B, J, H, W = 2, 4, 16, 16
    output = jax.random.normal(k1, (B, J, H, W), dtype=jnp.float32)
    target = jax.random.normal(k2, (B, J, H, W), dtype=jnp.float32)
    target_weight = jax.random.uniform(k3, (B, J, 1), dtype=jnp.float32)

    loss = joints_mse_loss(output, target, target_weight, use_target_weight=True)
    jax.block_until_ready(loss)
    ref = _reference(output, target, target_weight, use_target_weight=True)
    assert jnp.allclose(loss, ref, rtol=1e-5, atol=1e-6), (loss, ref)

    loss_nw = joints_mse_loss(output, target, target_weight, use_target_weight=False)
    jax.block_until_ready(loss_nw)
    ref_nw = _reference(output, target, target_weight, use_target_weight=False)
    assert jnp.allclose(loss_nw, ref_nw, rtol=1e-5, atol=1e-6), (loss_nw, ref_nw)

    # Multi-tile path (accumulator across grid steps; 2-way split on 2-TC chips).
    k4, k5, k6 = jax.random.split(jax.random.PRNGKey(1), 3)
    B2, J2, H2, W2 = 8, 16, 16, 16
    o2 = jax.random.normal(k4, (B2, J2, H2, W2), dtype=jnp.float32)
    t2 = jax.random.normal(k5, (B2, J2, H2, W2), dtype=jnp.float32)
    tw2 = jax.random.uniform(k6, (B2, J2, 1), dtype=jnp.float32)
    l2 = joints_mse_loss(o2, t2, tw2, use_target_weight=True, row_tile=48)
    jax.block_until_ready(l2)
    r2 = _reference(o2, t2, tw2, use_target_weight=True)
    assert jnp.allclose(l2, r2, rtol=1e-4, atol=1e-6), (l2, r2)

    # Non-(8,128)-friendly shapes: H*W not %128, B*J not %8 -> overhanging
    # edge tile masked in-kernel, no wrapper-side padding copies.
    k7, k8, k9 = jax.random.split(jax.random.PRNGKey(2), 3)
    B3, J3, H3, W3 = 3, 5, 10, 10
    o3 = jax.random.normal(k7, (B3, J3, H3, W3), dtype=jnp.float32)
    t3 = jax.random.normal(k8, (B3, J3, H3, W3), dtype=jnp.float32)
    tw3 = jax.random.uniform(k9, (B3, J3, 1), dtype=jnp.float32)
    l3 = joints_mse_loss(o3, t3, tw3, use_target_weight=True)
    jax.block_until_ready(l3)
    r3 = _reference(o3, t3, tw3, use_target_weight=True)
    assert jnp.allclose(l3, r3, rtol=1e-5, atol=1e-6), (l3, r3)

    # Larger rows in bf16: exercises the chunked in-kernel accumulation
    # (fori_loop path on single-TC chips) and the native-dtype upcast.
    k10, k11, k12 = jax.random.split(jax.random.PRNGKey(3), 3)
    B4, J4, H4, W4 = 16, 40, 16, 16
    o4 = jax.random.normal(k10, (B4, J4, H4, W4), dtype=jnp.bfloat16)
    t4 = jax.random.normal(k11, (B4, J4, H4, W4), dtype=jnp.bfloat16)
    tw4 = jax.random.uniform(k12, (B4, J4, 1), dtype=jnp.float32)
    l4 = joints_mse_loss(o4, t4, tw4, use_target_weight=True)
    jax.block_until_ready(l4)
    r4 = _reference(o4, t4, tw4, use_target_weight=True)
    assert jnp.allclose(l4, r4, rtol=1e-4, atol=1e-6), (l4, r4)

    print("KERNEL_OK")
</pallas_src>

<mosaic_0001>
module attributes {stable_mosaic.version = 11 : i64} {
  func.func @_joints_mse_kernel(%arg0: i32, %arg1: i32, %arg2: memref<8x256xf32, #tpu.memory_space<vmem>>, %arg3: memref<8x256xf32, #tpu.memory_space<vmem>>, %arg4: memref<8x1xf32, #tpu.memory_space<vmem>>, %arg5: memref<1x128xf32, #tpu.memory_space<vmem>>, %arg6: memref<8x256xf32, #tpu.memory_space<vmem>>) attributes {dimension_semantics = [#tpu.dimension_semantics<arbitrary>, #tpu.dimension_semantics<arbitrary>], iteration_bounds = array<i64: 1, 1>, scalar_prefetch = 0 : i64, scratch_operands = 1 : i64, tpu.core_type = #tpu.core_type<tc>, window_params = [{transform_indices = @transform_0, window_bounds = array<i64: 8, 256>}, {transform_indices = @transform_1, window_bounds = array<i64: 8, 256>}, {pipeline_mode = #tpu.pipeline_mode<synchronous>, transform_indices = @transform_2, window_bounds = array<i64: 8, 1>}, {transform_indices = @transform_3, window_bounds = array<i64: 1, 128>}]} {
    %c0_i32 = arith.constant 0 : i32
    %0 = arith.cmpi eq, %arg1, %c0_i32 : i32
    %1 = arith.extui %0 : i1 to i32
    %c0_i32_0 = arith.constant 0 : i32
    %2 = arith.cmpi ne, %1, %c0_i32_0 : i32
    scf.if %2 {
      %cst = arith.constant 0.000000e+00 : f32
      %22 = vector.broadcast %cst : f32 to vector<8x256xf32>
      %c0_12 = arith.constant 0 : index
      %c0_13 = arith.constant 0 : index
      %23 = vector.load %arg6[%c0_12, %c0_13] : memref<8x256xf32, #tpu.memory_space<vmem>>, vector<8x256xf32>
      tpu.vector_store %arg6[%c0_12, %c0_13], %22 {strides = array<i32>} : memref<8x256xf32, #tpu.memory_space<vmem>>, vector<8x256xf32>,
    } else {
    }
    %c1_i32 = arith.constant 1 : i32
    %3 = arith.muli %arg0, %c1_i32 : i32
    %4 = arith.addi %3, %arg1 : i32
    %c0 = arith.constant 0 : index
    %c0_1 = arith.constant 0 : index
    %5 = vector.load %arg2[%c0, %c0_1] : memref<8x256xf32, #tpu.memory_space<vmem>>, vector<8x256xf32>
    %c0_2 = arith.constant 0 : index
    %c0_3 = arith.constant 0 : index
    %6 = vector.load %arg3[%c0_2, %c0_3] : memref<8x256xf32, #tpu.memory_space<vmem>>, vector<8x256xf32>
    %7 = arith.subf %5, %6 : vector<8x256xf32>
    %c8_i32 = arith.constant 8 : i32
    %8 = arith.muli %4, %c8_i32 : i32
    %c0_i32_4 = arith.constant 0 : i32
    %9 = arith.addi %8, %c0_i32_4 : i32
    %10 = tpu.assume_multiple %9, 8 : i32
    %11 = arith.index_cast %10 : i32 to index
    %c0_5 = arith.constant 0 : index
    %12 = vector.load %arg4[%11, %c0_5] : memref<8x1xf32, #tpu.memory_space<vmem>>, vector<8x1xf32>
    %13 = vector.broadcast %12 : vector<8x1xf32> to vector<8x256xf32>
    %14 = arith.mulf %7, %13 : vector<8x256xf32>
    %15 = arith.mulf %14, %14 : vector<8x256xf32>
    %c0_6 = arith.constant 0 : index
    %c0_7 = arith.constant 0 : index
    %16 = vector.load %arg6[%c0_6, %c0_7] : memref<8x256xf32, #tpu.memory_space<vmem>>, vector<8x256xf32>
    %17 = arith.addf %16, %15 : vector<8x256xf32>
    %c0_8 = arith.constant 0 : index
    %c0_9 = arith.constant 0 : index
    %18 = vector.load %arg6[%c0_8, %c0_9] : memref<8x256xf32, #tpu.memory_space<vmem>>, vector<8x256xf32>
    tpu.vector_store %arg6[%c0_8, %c0_9], %17 {strides = array<i32>} : memref<8x256xf32, #tpu.memory_space<vmem>>, vector<8x256xf32>,
    %c0_i32_10 = arith.constant 0 : i32
    %19 = arith.cmpi eq, %arg1, %c0_i32_10 : i32
    %20 = arith.extui %19 : i1 to i32
    %c0_i32_11 = arith.constant 0 : i32
    %21 = arith.cmpi ne, %20, %c0_i32_11 : i32
    scf.if %21 {
      %c0_12 = arith.constant 0 : index
      %c0_13 = arith.constant 0 : index
      %22 = vector.load %arg6[%c0_12, %c0_13] : memref<8x256xf32, #tpu.memory_space<vmem>>, vector<8x256xf32>
      %23 = vector.shape_cast %22 : vector<8x256xf32> to vector<1x8x256xf32>
      %cst = arith.constant dense<0.000000e+00> : vector<1xf32>
      %24 = vector.multi_reduction <add>, %23, %cst [1, 2] : vector<1x8x256xf32> to vector<1xf32>
      %25 = vector.shape_cast %24 : vector<1xf32> to vector<1x1x1xf32>
      %26 = vector.extract %25[0, 0, 0] : f32 from vector<1x1x1xf32>
      %cst_14 = arith.constant 2.44140625E-4 : f32
      %27 = arith.mulf %26, %cst_14 : f32
      %cst_15 = arith.constant 1.000000e+00 : f32
      %28 = vector.broadcast %cst_15 : f32 to vector<1x128xf32>
      %29 = vector.broadcast %27 : f32 to vector<1x128xf32>
      %30 = arith.mulf %29, %28 : vector<1x128xf32>
      %c0_16 = arith.constant 0 : index
      %c0_17 = arith.constant 0 : index
      %31 = vector.load %arg5[%c0_16, %c0_17] : memref<1x128xf32, #tpu.memory_space<vmem>>, vector<1x128xf32>
      tpu.vector_store %arg5[%c0_16, %c0_17], %30 {strides = array<i32>} : memref<1x128xf32, #tpu.memory_space<vmem>>, vector<1x128xf32>,
    } else {
    }
    return
  }
  func.func @transform_0(%arg0: i32, %arg1: i32) -> (i32, i32) {
    %c1_i32 = arith.constant 1 : i32
    %0 = arith.muli %arg0, %c1_i32 : i32
    %1 = arith.addi %0, %arg1 : i32
    %c0_i32 = arith.constant 0 : i32
    %c0_i32_0 = arith.constant 0 : i32
    return %1, %c0_i32 : i32, i32
  }
  func.func @transform_1(%arg0: i32, %arg1: i32) -> (i32, i32) {
    %c1_i32 = arith.constant 1 : i32
    %0 = arith.muli %arg0, %c1_i32 : i32
    %1 = arith.addi %0, %arg1 : i32
    %c0_i32 = arith.constant 0 : i32
    %c0_i32_0 = arith.constant 0 : i32
    return %1, %c0_i32 : i32, i32
  }
  func.func @transform_2(%arg0: i32, %arg1: i32) -> (i32, i32) {
    %c0_i32 = arith.constant 0 : i32
    %c0_i32_0 = arith.constant 0 : i32
    %c0_i32_1 = arith.constant 0 : i32
    return %c0_i32, %c0_i32_0 : i32, i32
  }
  func.func @transform_3(%arg0: i32, %arg1: i32) -> (i32, i32) {
    %c0_i32 = arith.constant 0 : i32
    %c0_i32_0 = arith.constant 0 : i32
    return %c0_i32, %arg0 : i32, i32
  }
}

</mosaic_0001>

<llo_original>
// kernel: tpu_custom_call.1
$region0: #{tpu_custom_call.1}
  #allocation0 [shape = 'u32[]', space=smem, size = 0x4, offset = 0x4, fixed_abs, tag = 'smem constant byte address 0x4 - core index']
  #allocation1 [shape = 'u32[72,128]{1,0:T(1,128)}', space=vmem, size = 0x9000, scoped, tag = 'internal scratch']
  #allocation2 [shape = 'f32[8,256]{1,0:T(8,128)}', space=vmem, size = 0x2000, scoped, tag = 'scratch operand']
  %s0 = inlined_call_operand.hbm [shape: f32[8,256], index: 0, kind: input, shape index: {}]
  %s1 = inlined_call_operand.hbm [shape: f32[8,256], index: 1, kind: input, shape index: {}]
  %s2 = inlined_call_operand.vmem [shape: f32[8,1], index: 2, kind: input, shape index: {}]
  %s3 = inlined_call_operand.hbm [shape: f32[1,128], index: 3, kind: output, shape index: {}]
  %s4 = sld [smem:[#allocation0]]
  $region38: #{tpu_custom_call.1} parent=0
    _
  %s6 = ssub.s32 1, %s4
  %s7 = scalar_select 0, %s6, %s4
  $region1: #{tpu_custom_call.1} parent=0
    #allocation3 [shape = 'u8[8192]{0}', space=vmem, size = 0x2000, scoped, tag = 'input window, operand 0, single buffered']
    #allocation4 [shape = 's32[1]{0}', space=sflag, size = 0x4, scoped, tag = 'scoped memory for tpu_custom_call.1']
    #allocation5 [shape = 's32[1]{0}', space=sflag, size = 0x4, scoped, tag = 'scoped memory for tpu_custom_call.1']
    #allocation6 [shape = 'u8[8192]{0}', space=vmem, size = 0x2000, scoped, tag = 'input window, operand 1, single buffered']
    #allocation7 [shape = 's32[1]{0}', space=sflag, size = 0x4, scoped, tag = 'scoped memory for tpu_custom_call.1']
    #allocation8 [shape = 'u8[512]{0}', space=vmem, size = 0x400, scoped, tag = 'output window, operand 0, single buffered']
    %8 = vsyncpa [#allocation4], 0
    %9 = vsyncpa [#allocation7], 0
    %10 = vsyncpa [#allocation5], 0
    // Predicated region
    $region2: #{tpu_custom_call.1} parent=1 // pred_check
      _
    $region3: #{tpu_custom_call.1} parent=1 // pred_check_branch
      %12 = sbr.rel (0) target = $region5
    $region4: #{tpu_custom_call.1} parent=1 // pred_region
      %s13 = sadd.s32 0, 0
      %15 = vsyncadd [#allocation4], 0
      %s16 = smul.addr %s13, 2
      %s17 = smul.addr %s16, 8
      %s18 = scalar_lea.hbm %s0, %s17
      %s20 = sshll.u32 %s18, 4
      %s21 = int_to_ptr.hbm [resolvable:$true] %s20
      %s22 = sshll.u32 [#allocation3], 4
      %s23 = int_to_ptr.vmem [resolvable:$true] %s22
      %25 = dma.hbm_to_vmem [thread:$0]  %s21, 256, %s23, [#allocation4]
    $region5: #{tpu_custom_call.1} parent=1 // pred_fallthru
      _
    // Predicated region
    $region6: #{tpu_custom_call.1} parent=1 // pred_check
      _
    $region7: #{tpu_custom_call.1} parent=1 // pred_check_branch
      %27 = sbr.rel (0) target = $region9
    $region8: #{tpu_custom_call.1} parent=1 // pred_region
      %s28 = sadd.s32 0, 0
      %30 = vsyncadd [#allocation7], 0
      %s31 = smul.addr %s28, 2
      %s32 = smul.addr %s31, 8
      %s33 = scalar_lea.hbm %s1, %s32
      %s35 = sshll.u32 %s33, 4
      %s36 = int_to_ptr.hbm [resolvable:$true] %s35
      %s37 = sshll.u32 [#allocation6], 4
      %s38 = int_to_ptr.vmem [resolvable:$true] %s37
      %40 = dma.hbm_to_vmem [thread:$0]  %s36, 256, %s38, [#allocation7]
    $region9: #{tpu_custom_call.1} parent=1 // pred_fallthru
      _
    // Predicated region
    $region10: #{tpu_custom_call.1} parent=1 // pred_check
      _
    $region11: #{tpu_custom_call.1} parent=1 // pred_check_branch
      %42 = sbr.rel (0) target = $region13
    $region12: #{tpu_custom_call.1} parent=1 // pred_region
      _
    $region13: #{tpu_custom_call.1} parent=1 // pred_fallthru
      _
    // Predicated region
    $region14: #{tpu_custom_call.1} parent=1 // pred_check
      _
    $region15: #{tpu_custom_call.1} parent=1 // pred_check_branch
      %44 = sbr.rel (0) target = $region17
    $region16: #{tpu_custom_call.1} parent=1 // pred_region
      %46 = dma.done [#allocation4], 256
    $region17: #{tpu_custom_call.1} parent=1 // pred_fallthru
      _
    // Predicated region
    $region18: #{tpu_custom_call.1} parent=1 // pred_check
      _
    $region19: #{tpu_custom_call.1} parent=1 // pred_check_branch
      %48 = sbr.rel (0) target = $region21
    $region20: #{tpu_custom_call.1} parent=1 // pred_region
      %50 = dma.done [#allocation7], 256
    $region21: #{tpu_custom_call.1} parent=1 // pred_fallthru
      _
    %s51 = sadd.s32 0, 0
    %s52 = sadd.s32 0, 0
    %p53 = scmp.eq.s32.totalorder 0, 0
    // Predicated region
    $region22: #{tpu_custom_call.1} parent=1 // pred_check
      %p54 = pneg %p53
    $region23: #{tpu_custom_call.1} parent=1 // pred_check_branch
      %56 = sbr.rel (%p54) target = $region25
    $region24: #{tpu_custom_call.1} parent=1 // pred_region
      %57 = vst [vmem:[#allocation2] sm:$0xff] 0.0
      %58 = vst [vmem:[#allocation2 + $0x8] sm:$0xff] 0.0
    $region25: #{tpu_custom_call.1} parent=1 // pred_fallthru
      _
    %s59 = sadd.s32 0, 0
    %v60 = vld [vmem:[#allocation3] sm:$0xff]
    %v61 = vld [vmem:[#allocation3 + $0x8] sm:$0xff]
    %v62 = vld [vmem:[#allocation6] sm:$0xff]
    %v63 = vld [vmem:[#allocation6 + $0x8] sm:$0xff]
    %v64 = vsub.f32 %v60, %v62
    %v65 = vsub.f32 %v61, %v63
    %s66 = smul.u32 %s59, 8
    %s67 = scalar_lea.vmem %s2, %s66
    %v68 = vld [vmem:[%s67] sm:$0xff]
    %70 = vset.pattern.permute.xlu0 0
    %71 = vperm.xlu0 %70, %v68
    %v72 = vpop.permute.xlu0 %71
    %v74 = vmul.f32 %v64, %v72
    %v75 = vmul.f32 %v65, %v72
    %v76 = vmul.f32 %v74, %v74
    %v77 = vmul.f32 %v75, %v75
    %v78 = vld [vmem:[#allocation2] sm:$0xff]
    %v79 = vld [vmem:[#allocation2 + $0x8] sm:$0xff]
    %v80 = vadd.f32 %v78, %v76
    %v81 = vadd.f32 %v79, %v77
    %82 = vst [vmem:[#allocation2] sm:$0xff] %v80
    %83 = vst [vmem:[#allocation2 + $0x8] sm:$0xff] %v81
    // Predicated region
    $region26: #{tpu_custom_call.1} parent=1 // pred_check
      %p84 = pneg %p53
    $region27: #{tpu_custom_call.1} parent=1 // pred_check_branch
      %86 = sbr.rel (%p84) target = $region29
    $region28: #{tpu_custom_call.1} parent=1 // pred_region
      %v87 = vld [vmem:[#allocation2] sm:$0xff]
      %v88 = vld [vmem:[#allocation2 + $0x8] sm:$0xff]
      %v89 = vadd.f32 %v87, %v88
      %90 = vadd.xlane.f32.xlu0 %v89
      %v91 = vpop.xlane.xlu0 %90
      %v92 = vrot.slane %v91, 4
      %v93 = vadd.f32 %v91, %v92
      %v94 = vrot.slane %v93, 2
      %v95 = vadd.f32 %v93, %v94
      %v96 = vrot.slane %v95, 1
      %v97 = vadd.f32 %v95, %v96
      %s98 = vtos %v97
      %s99 = smul.f32 %s98, 0.00024414063
      %v100 = vstv %s99
      %101 = vst [vmem:[#allocation8] sm:$0x1] %v100
    $region29: #{tpu_custom_call.1} parent=1 // pred_fallthru
      _
    // Predicated region
    $region30: #{tpu_custom_call.1} parent=1 // pred_check
      _
    $region31: #{tpu_custom_call.1} parent=1 // pred_check_branch
      %103 = sbr.rel (0) target = $region33
    $region32: #{tpu_custom_call.1} parent=1 // pred_region
      %105 = vsyncadd [#allocation5], 0
      %s107 = sshll.u32 [#allocation8], 4
      %s108 = int_to_ptr.vmem [resolvable:$true] %s107
      %s109 = sshll.u32 %s3, 4
      %s110 = int_to_ptr.hbm [resolvable:$true] %s109
      %112 = dma.vmem_to_hbm [thread:$0]  %s108, 16, %s110, [#allocation5]
    $region33: #{tpu_custom_call.1} parent=1 // pred_fallthru
      _
    // Predicated region
    $region34: #{tpu_custom_call.1} parent=1 // pred_check
      _
    $region35: #{tpu_custom_call.1} parent=1 // pred_check_branch
      %114 = sbr.rel (0) target = $region37
    $region36: #{tpu_custom_call.1} parent=1 // pred_region
      %116 = dma.done [#allocation5], 16
    $region37: #{tpu_custom_call.1} parent=1 // pred_fallthru
      _
    %117 = vsyncpa [#allocation4], 1
    %118 = vsyncpa [#allocation7], 1
    %119 = vsyncpa [#allocation5], 1

</llo_original>
